<compile_context>
chip_gen: v7x
topology: tpu7x:2x2x1
jax: 0.10.0
libtpu: 0.0.40
codegen_flags: <defaults>
</compile_context>

<pallas_src>
import functools

import jax
import jax.numpy as jnp
from jax.experimental import pallas as pl
from jax.experimental.pallas import tpu as pltpu


def _grouped_dilated_conv_kernel(w_ref, b_ref, x_ref, o_ref, *,
                                 group_width, dilation, max_dilation,
                                 stride, out_h, out_w, in_w, use_bias):
    """One (batch, channel-group) step of a grouped dilated 3x3 conv.

    w_ref: SMEM (conv_channel * group_width * 9,) f32, flat [co, ci, kh, kw]
    b_ref: SMEM (conv_channel,) f32
    x_ref: VMEM (1, group_width, H + 2*dmax, W + 2*dmax)  (input, padded by dmax)
    o_ref: VMEM (1, group_width, out_h, out_w)
    """
    gw = group_width
    d = dilation
    s = stride
    g = pl.program_id(1)          # group index within this split (dynamic)
    co_base = g * gw              # first output channel of this group
    halo = max_dilation - d       # offset correction: x is padded by max_dilation

    if s > 1:
        # 0/1 column-selection matrix: picks every s-th column with one small
        # MXU matmul (keeps lane-dim subsampling on a well-supported path).
        src = jax.lax.broadcasted_iota(jnp.int32, (in_w, out_w), 0)
        dst = jax.lax.broadcasted_iota(jnp.int32, (in_w, out_w), 1)
        col_sel = (src == dst * s).astype(jnp.float32)

    # f32 accumulators for all gw output channels of the group (VPU path; for
    # large group_width an im2col MXU path would be preferable).
    accs = [jnp.zeros((out_h, in_w), jnp.float32) for _ in range(gw)]

    for ci in range(gw):
        for kh in range(3):
            row_start = halo + kh * d                      # static
            if s == 1:
                rows = pl.ds(row_start, out_h)
            else:
                rows = pl.ds(row_start, out_h, stride=s)   # strided row read
            for kw in range(3):
                col_start = halo + kw * d                  # static
                patch = x_ref[0, ci, rows, pl.ds(col_start, in_w)]
                patch = patch.astype(jnp.float32)
                # Reuse each loaded patch across all gw output channels.
                for co in range(gw):
                    w_idx = ((co_base + co) * gw + ci) * 9 + kh * 3 + kw
                    accs[co] = accs[co] + w_ref[w_idx] * patch

    for co in range(gw):
        acc = accs[co]
        if use_bias:
            acc = acc + b_ref[co_base + co]
        if s > 1:
            acc = jnp.dot(acc, col_sel, preferred_element_type=jnp.float32)
        o_ref[0, co] = acc.astype(o_ref.dtype)


def _dilated_conv_split(x_pad, w_flat, b, *, split_idx, groups, group_width,
                        dilation, max_dilation, stride, out_h, out_w, in_w,
                        use_bias, out_dtype):
    """One dilation branch: grouped dilated 3x3 conv over its channel range."""
    N, _, Hp, Wp = x_pad.shape
    conv_channel = groups * group_width
    ch_block_off = split_idx * groups   # channel-block offset of this split

    kernel = functools.partial(
        _grouped_dilated_conv_kernel,
        group_width=group_width, dilation=dilation, max_dilation=max_dilation,
        stride=stride, out_h=out_h, out_w=out_w, in_w=in_w, use_bias=use_bias)

    return pl.pallas_call(
        kernel,
        out_shape=jax.ShapeDtypeStruct((N, conv_channel, out_h, out_w), out_dtype),
        grid_spec=pltpu.PrefetchScalarGridSpec(
            num_scalar_prefetch=0,
            grid=(N, groups),
            in_specs=[
                # Flattened weights & bias resident in SMEM (scalar reads).
                pl.BlockSpec(memory_space=pltpu.MemorySpace.SMEM),
                pl.BlockSpec(memory_space=pltpu.MemorySpace.SMEM),
                # Padded input: pick this split's channel group directly from
                # the full tensor (no jnp.split copies).
                pl.BlockSpec((1, group_width, Hp, Wp),
                             lambda n, g: (n, ch_block_off + g, 0, 0)),
            ],
            out_specs=pl.BlockSpec((1, group_width, out_h, out_w),
                                   lambda n, g: (n, g, 0, 0)),
        ),
        compiler_params=pltpu.CompilerParams(
            dimension_semantics=("parallel", "parallel")),
    )(w_flat, b, x_pad)


class DilatedConvPallas:
    """Pallas equivalent of regseg.DilatedConv:
    split channels -> per-split grouped dilated 3x3 conv -> concat."""

    def __init__(self, input_channel, dilations, group_width, stride, bias, key):
        num_splits = len(dilations)
        assert input_channel % num_splits == 0
        conv_channel = input_channel // num_splits
        assert conv_channel % group_width == 0
        self.groups = conv_channel // group_width
        self.num_splits = num_splits
        self.conv_channel = conv_channel
        self.dilations = list(dilations)
        self.group_width = group_width
        self.stride = stride
        self.use_bias = bias

        # Deterministic init mimicking PyTorch Conv2d default (U[-1/sqrt(fan_in), ...]).
        fan_in = group_width * 3 * 3
        bound = 1.0 / (fan_in ** 0.5)
        self.weights, self.weights_flat, self.biases = [], [], []
        for _ in dilations:
            key, kw_, kb_ = jax.random.split(key, 3)
            w = jax.random.uniform(kw_, (conv_channel, group_width, 3, 3),
                                   jnp.float32, -bound, bound)
            self.weights.append(w)
            self.weights_flat.append(w.reshape(-1))
            if bias:
                self.biases.append(jax.random.uniform(
                    kb_, (conv_channel,), jnp.float32, -bound, bound))
            else:
                self.biases.append(jnp.zeros((conv_channel,), jnp.float32))

    def __call__(self, x):
        N, C, H, W = x.shape
        dmax = max(self.dilations)
        # Pad the full input once by the maximum dilation; per-split offsets are
        # corrected inside the kernel (halo = dmax - d).
        x_pad = jnp.pad(x, ((0, 0), (0, 0), (dmax, dmax), (dmax, dmax)))
        out_h = (H - 1) // self.stride + 1
        out_w = (W - 1) // self.stride + 1
        outs = []
        for i, d in enumerate(self.dilations):
            outs.append(_dilated_conv_split(
                x_pad, self.weights_flat[i], self.biases[i],
                split_idx=i, groups=self.groups, group_width=self.group_width,
                dilation=d, max_dilation=dmax, stride=self.stride,
                out_h=out_h, out_w=out_w, in_w=W,
                use_bias=self.use_bias, out_dtype=x.dtype))
        return jnp.concatenate(outs, axis=1)


def reference(x, mod: DilatedConvPallas):
    """Pure-JAX reference (matches torch grouped dilated Conv2d semantics)."""
    splits = jnp.split(x, mod.num_splits, axis=1)
    outs = []
    for i, d in enumerate(mod.dilations):
        out = jax.lax.conv_general_dilated(
            splits[i], mod.weights[i],
            window_strides=(mod.stride, mod.stride),
            padding=((d, d), (d, d)),
            rhs_dilation=(d, d),
            dimension_numbers=("NCHW", "OIHW", "NCHW"),
            feature_group_count=mod.groups)
        if mod.use_bias:
            out = out + mod.biases[i][None, :, None, None]
        outs.append(out)
    return jnp.concatenate(outs, axis=1)


if __name__ == "__main__":
    key = jax.random.PRNGKey(0)
    k1, k2, kx1, kx2 = jax.random.split(key, 4)

    # Test 1: config consistent with regseg.DilatedConv asserts.
    input_channel, dilations, group_width, stride, bias = 8, [1, 2], 2, 1, True
    x1 = jax.random.normal(kx1, (2, input_channel, 16, 16), jnp.float32)
    mod1 = DilatedConvPallas(input_channel, dilations, group_width, stride, bias, k1)
    out1 = jax.block_until_ready(mod1(x1))
    ref1 = reference(x1, mod1)
    assert out1.shape == ref1.shape, (out1.shape, ref1.shape)
    assert jnp.allclose(out1, ref1, atol=1e-4, rtol=1e-4), "mismatch vs reference conv (test 1)"

    # Test 2: larger dilation / group_width, no bias.
    x2 = jax.random.normal(kx2, (2, 8, 16, 16), jnp.float32)
    mod2 = DilatedConvPallas(8, [1, 4], 4, 1, False, k2)
    out2 = jax.block_until_ready(mod2(x2))
    ref2 = reference(x2, mod2)
    assert out2.shape == ref2.shape, (out2.shape, ref2.shape)
    assert jnp.allclose(out2, ref2, atol=1e-4, rtol=1e-4), "mismatch vs reference conv (test 2)"

    print("KERNEL_OK")
</pallas_src>

<mosaic_0001>
module attributes {stable_mosaic.version = 11 : i64} {
  func.func @_grouped_dilated_conv_kernel(%arg0: i32, %arg1: i32, %arg2: memref<72xf32, #tpu.memory_space<smem>>, %arg3: memref<4xf32, #tpu.memory_space<smem>>, %arg4: memref<1x2x20x20xf32, #tpu.memory_space<vmem>>, %arg5: memref<1x2x16x16xf32, #tpu.memory_space<vmem>>) attributes {dimension_semantics = [#tpu.dimension_semantics<parallel>, #tpu.dimension_semantics<parallel>], iteration_bounds = array<i64: 2, 2>, scalar_prefetch = 0 : i64, scratch_operands = 0 : i64, tpu.core_type = #tpu.core_type<tc>, window_params = [{transform_indices = @transform_0, window_bounds = array<i64: 72>}, {transform_indices = @transform_1, window_bounds = array<i64: 4>}, {transform_indices = @transform_2, window_bounds = array<i64: 1, 2, 20, 20>}, {transform_indices = @transform_3, window_bounds = array<i64: 1, 2, 16, 16>}]} {
    %c2_i32 = arith.constant 2 : i32
    %0 = arith.muli %arg1, %c2_i32 : i32
    %cst = arith.constant 0.000000e+00 : f32
    %1 = vector.broadcast %cst : f32 to vector<16x16xf32>
    %cst_0 = arith.constant 0.000000e+00 : f32
    %2 = vector.broadcast %cst_0 : f32 to vector<16x16xf32>
    %c0 = arith.constant 0 : index
    %c0_1 = arith.constant 0 : index
    %c1 = arith.constant 1 : index
    %c1_2 = arith.constant 1 : index
    %3 = vector.load %arg4[%c0, %c0_1, %c1, %c1_2] : memref<1x2x20x20xf32, #tpu.memory_space<vmem>>, vector<1x1x16x16xf32>
    %4 = vector.shape_cast %3 : vector<1x1x16x16xf32> to vector<16x16xf32>
    %c0_i32 = arith.constant 0 : i32
    %5 = arith.addi %0, %c0_i32 : i32
    %c2_i32_3 = arith.constant 2 : i32
    %6 = arith.muli %5, %c2_i32_3 : i32
    %c0_i32_4 = arith.constant 0 : i32
    %7 = arith.addi %6, %c0_i32_4 : i32
    %c9_i32 = arith.constant 9 : i32
    %8 = arith.muli %7, %c9_i32 : i32
    %c0_i32_5 = arith.constant 0 : i32
    %9 = arith.addi %8, %c0_i32_5 : i32
    %c0_i32_6 = arith.constant 0 : i32
    %10 = arith.addi %9, %c0_i32_6 : i32
    %11 = arith.index_cast %10 : i32 to index
    %12 = memref.load %arg2[%11] : memref<72xf32, #tpu.memory_space<smem>>
    %13 = vector.broadcast %12 : f32 to vector<16x16xf32>
    %14 = arith.mulf %13, %4 : vector<16x16xf32>
    %15 = arith.addf %1, %14 : vector<16x16xf32>
    %c1_i32 = arith.constant 1 : i32
    %16 = arith.addi %0, %c1_i32 : i32
    %c2_i32_7 = arith.constant 2 : i32
    %17 = arith.muli %16, %c2_i32_7 : i32
    %c0_i32_8 = arith.constant 0 : i32
    %18 = arith.addi %17, %c0_i32_8 : i32
    %c9_i32_9 = arith.constant 9 : i32
    %19 = arith.muli %18, %c9_i32_9 : i32
    %c0_i32_10 = arith.constant 0 : i32
    %20 = arith.addi %19, %c0_i32_10 : i32
    %c0_i32_11 = arith.constant 0 : i32
    %21 = arith.addi %20, %c0_i32_11 : i32
    %22 = arith.index_cast %21 : i32 to index
    %23 = memref.load %arg2[%22] : memref<72xf32, #tpu.memory_space<smem>>
    %24 = vector.broadcast %23 : f32 to vector<16x16xf32>
    %25 = arith.mulf %24, %4 : vector<16x16xf32>
    %26 = arith.addf %2, %25 : vector<16x16xf32>
    %c0_12 = arith.constant 0 : index
    %c0_13 = arith.constant 0 : index
    %c1_14 = arith.constant 1 : index
    %c2 = arith.constant 2 : index
    %27 = vector.load %arg4[%c0_12, %c0_13, %c1_14, %c2] : memref<1x2x20x20xf32, #tpu.memory_space<vmem>>, vector<1x1x16x16xf32>
    %28 = vector.shape_cast %27 : vector<1x1x16x16xf32> to vector<16x16xf32>
    %c0_i32_15 = arith.constant 0 : i32
    %29 = arith.addi %0, %c0_i32_15 : i32
    %c2_i32_16 = arith.constant 2 : i32
    %30 = arith.muli %29, %c2_i32_16 : i32
    %c0_i32_17 = arith.constant 0 : i32
    %31 = arith.addi %30, %c0_i32_17 : i32
    %c9_i32_18 = arith.constant 9 : i32
    %32 = arith.muli %31, %c9_i32_18 : i32
    %c0_i32_19 = arith.constant 0 : i32
    %33 = arith.addi %32, %c0_i32_19 : i32
    %c1_i32_20 = arith.constant 1 : i32
    %34 = arith.addi %33, %c1_i32_20 : i32
    %35 = arith.index_cast %34 : i32 to index
    %36 = memref.load %arg2[%35] : memref<72xf32, #tpu.memory_space<smem>>
    %37 = vector.broadcast %36 : f32 to vector<16x16xf32>
    %38 = arith.mulf %37, %28 : vector<16x16xf32>
    %39 = arith.addf %15, %38 : vector<16x16xf32>
    %c1_i32_21 = arith.constant 1 : i32
    %40 = arith.addi %0, %c1_i32_21 : i32
    %c2_i32_22 = arith.constant 2 : i32
    %41 = arith.muli %40, %c2_i32_22 : i32
    %c0_i32_23 = arith.constant 0 : i32
    %42 = arith.addi %41, %c0_i32_23 : i32
    %c9_i32_24 = arith.constant 9 : i32
    %43 = arith.muli %42, %c9_i32_24 : i32
    %c0_i32_25 = arith.constant 0 : i32
    %44 = arith.addi %43, %c0_i32_25 : i32
    %c1_i32_26 = arith.constant 1 : i32
    %45 = arith.addi %44, %c1_i32_26 : i32
    %46 = arith.index_cast %45 : i32 to index
    %47 = memref.load %arg2[%46] : memref<72xf32, #tpu.memory_space<smem>>
    %48 = vector.broadcast %47 : f32 to vector<16x16xf32>
    %49 = arith.mulf %48, %28 : vector<16x16xf32>
    %50 = arith.addf %26, %49 : vector<16x16xf32>
    %c0_27 = arith.constant 0 : index
    %c0_28 = arith.constant 0 : index
    %c1_29 = arith.constant 1 : index
    %c3 = arith.constant 3 : index
    %51 = vector.load %arg4[%c0_27, %c0_28, %c1_29, %c3] : memref<1x2x20x20xf32, #tpu.memory_space<vmem>>, vector<1x1x16x16xf32>
    %52 = vector.shape_cast %51 : vector<1x1x16x16xf32> to vector<16x16xf32>
    %c0_i32_30 = arith.constant 0 : i32
    %53 = arith.addi %0, %c0_i32_30 : i32
    %c2_i32_31 = arith.constant 2 : i32
    %54 = arith.muli %53, %c2_i32_31 : i32
    %c0_i32_32 = arith.constant 0 : i32
    %55 = arith.addi %54, %c0_i32_32 : i32
    %c9_i32_33 = arith.constant 9 : i32
    %56 = arith.muli %55, %c9_i32_33 : i32
    %c0_i32_34 = arith.constant 0 : i32
    %57 = arith.addi %56, %c0_i32_34 : i32
    %c2_i32_35 = arith.constant 2 : i32
    %58 = arith.addi %57, %c2_i32_35 : i32
    %59 = arith.index_cast %58 : i32 to index
    %60 = memref.load %arg2[%59] : memref<72xf32, #tpu.memory_space<smem>>
    %61 = vector.broadcast %60 : f32 to vector<16x16xf32>
    %62 = arith.mulf %61, %52 : vector<16x16xf32>
    %63 = arith.addf %39, %62 : vector<16x16xf32>
    %c1_i32_36 = arith.constant 1 : i32
    %64 = arith.addi %0, %c1_i32_36 : i32
    %c2_i32_37 = arith.constant 2 : i32
    %65 = arith.muli %64, %c2_i32_37 : i32
    %c0_i32_38 = arith.constant 0 : i32
    %66 = arith.addi %65, %c0_i32_38 : i32
    %c9_i32_39 = arith.constant 9 : i32
    %67 = arith.muli %66, %c9_i32_39 : i32
    %c0_i32_40 = arith.constant 0 : i32
    %68 = arith.addi %67, %c0_i32_40 : i32
    %c2_i32_41 = arith.constant 2 : i32
    %69 = arith.addi %68, %c2_i32_41 : i32
    %70 = arith.index_cast %69 : i32 to index
    %71 = memref.load %arg2[%70] : memref<72xf32, #tpu.memory_space<smem>>
    %72 = vector.broadcast %71 : f32 to vector<16x16xf32>
    %73 = arith.mulf %72, %52 : vector<16x16xf32>
    %74 = arith.addf %50, %73 : vector<16x16xf32>
    %c0_42 = arith.constant 0 : index
    %c0_43 = arith.constant 0 : index
    %c2_44 = arith.constant 2 : index
    %c1_45 = arith.constant 1 : index
    %75 = vector.load %arg4[%c0_42, %c0_43, %c2_44, %c1_45] : memref<1x2x20x20xf32, #tpu.memory_space<vmem>>, vector<1x1x16x16xf32>
    %76 = vector.shape_cast %75 : vector<1x1x16x16xf32> to vector<16x16xf32>
    %c0_i32_46 = arith.constant 0 : i32
    %77 = arith.addi %0, %c0_i32_46 : i32
    %c2_i32_47 = arith.constant 2 : i32
    %78 = arith.muli %77, %c2_i32_47 : i32
    %c0_i32_48 = arith.constant 0 : i32
    %79 = arith.addi %78, %c0_i32_48 : i32
    %c9_i32_49 = arith.constant 9 : i32
    %80 = arith.muli %79, %c9_i32_49 : i32
    %c3_i32 = arith.constant 3 : i32
    %81 = arith.addi %80, %c3_i32 : i32
    %c0_i32_50 = arith.constant 0 : i32
    %82 = arith.addi %81, %c0_i32_50 : i32
    %83 = arith.index_cast %82 : i32 to index
    %84 = memref.load %arg2[%83] : memref<72xf32, #tpu.memory_space<smem>>
    %85 = vector.broadcast %84 : f32 to vector<16x16xf32>
    %86 = arith.mulf %85, %76 : vector<16x16xf32>
    %87 = arith.addf %63, %86 : vector<16x16xf32>
    %c1_i32_51 = arith.constant 1 : i32
    %88 = arith.addi %0, %c1_i32_51 : i32
    %c2_i32_52 = arith.constant 2 : i32
    %89 = arith.muli %88, %c2_i32_52 : i32
    %c0_i32_53 = arith.constant 0 : i32
    %90 = arith.addi %89, %c0_i32_53 : i32
    %c9_i32_54 = arith.constant 9 : i32
    %91 = arith.muli %90, %c9_i32_54 : i32
    %c3_i32_55 = arith.constant 3 : i32
    %92 = arith.addi %91, %c3_i32_55 : i32
    %c0_i32_56 = arith.constant 0 : i32
    %93 = arith.addi %92, %c0_i32_56 : i32
    %94 = arith.index_cast %93 : i32 to index
    %95 = memref.load %arg2[%94] : memref<72xf32, #tpu.memory_space<smem>>
    %96 = vector.broadcast %95 : f32 to vector<16x16xf32>
    %97 = arith.mulf %96, %76 : vector<16x16xf32>
    %98 = arith.addf %74, %97 : vector<16x16xf32>
    %c0_57 = arith.constant 0 : index
    %c0_58 = arith.constant 0 : index
    %c2_59 = arith.constant 2 : index
    %c2_60 = arith.constant 2 : index
    %99 = vector.load %arg4[%c0_57, %c0_58, %c2_59, %c2_60] : memref<1x2x20x20xf32, #tpu.memory_space<vmem>>, vector<1x1x16x16xf32>
    %100 = vector.shape_cast %99 : vector<1x1x16x16xf32> to vector<16x16xf32>
    %c0_i32_61 = arith.constant 0 : i32
    %101 = arith.addi %0, %c0_i32_61 : i32
    %c2_i32_62 = arith.constant 2 : i32
    %102 = arith.muli %101, %c2_i32_62 : i32
    %c0_i32_63 = arith.constant 0 : i32
    %103 = arith.addi %102, %c0_i32_63 : i32
    %c9_i32_64 = arith.constant 9 : i32
    %104 = arith.muli %103, %c9_i32_64 : i32
    %c3_i32_65 = arith.constant 3 : i32
    %105 = arith.addi %104, %c3_i32_65 : i32
    %c1_i32_66 = arith.constant 1 : i32
    %106 = arith.addi %105, %c1_i32_66 : i32
    %107 = arith.index_cast %106 : i32 to index
    %108 = memref.load %arg2[%107] : memref<72xf32, #tpu.memory_space<smem>>
    %109 = vector.broadcast %108 : f32 to vector<16x16xf32>
    %110 = arith.mulf %109, %100 : vector<16x16xf32>
    %111 = arith.addf %87, %110 : vector<16x16xf32>
    %c1_i32_67 = arith.constant 1 : i32
    %112 = arith.addi %0, %c1_i32_67 : i32
    %c2_i32_68 = arith.constant 2 : i32
    %113 = arith.muli %112, %c2_i32_68 : i32
    %c0_i32_69 = arith.constant 0 : i32
    %114 = arith.addi %113, %c0_i32_69 : i32
    %c9_i32_70 = arith.constant 9 : i32
    %115 = arith.muli %114, %c9_i32_70 : i32
    %c3_i32_71 = arith.constant 3 : i32
    %116 = arith.addi %115, %c3_i32_71 : i32
    %c1_i32_72 = arith.constant 1 : i32
    %117 = arith.addi %116, %c1_i32_72 : i32
    %118 = arith.index_cast %117 : i32 to index
    %119 = memref.load %arg2[%118] : memref<72xf32, #tpu.memory_space<smem>>
    %120 = vector.broadcast %119 : f32 to vector<16x16xf32>
    %121 = arith.mulf %120, %100 : vector<16x16xf32>
    %122 = arith.addf %98, %121 : vector<16x16xf32>
    %c0_73 = arith.constant 0 : index
    %c0_74 = arith.constant 0 : index
    %c2_75 = arith.constant 2 : index
    %c3_76 = arith.constant 3 : index
    %123 = vector.load %arg4[%c0_73, %c0_74, %c2_75, %c3_76] : memref<1x2x20x20xf32, #tpu.memory_space<vmem>>, vector<1x1x16x16xf32>
    %124 = vector.shape_cast %123 : vector<1x1x16x16xf32> to vector<16x16xf32>
    %c0_i32_77 = arith.constant 0 : i32
    %125 = arith.addi %0, %c0_i32_77 : i32
    %c2_i32_78 = arith.constant 2 : i32
    %126 = arith.muli %125, %c2_i32_78 : i32
    %c0_i32_79 = arith.constant 0 : i32
    %127 = arith.addi %126, %c0_i32_79 : i32
    %c9_i32_80 = arith.constant 9 : i32
    %128 = arith.muli %127, %c9_i32_80 : i32
    %c3_i32_81 = arith.constant 3 : i32
    %129 = arith.addi %128, %c3_i32_81 : i32
    %c2_i32_82 = arith.constant 2 : i32
    %130 = arith.addi %129, %c2_i32_82 : i32
    %131 = arith.index_cast %130 : i32 to index
    %132 = memref.load %arg2[%131] : memref<72xf32, #tpu.memory_space<smem>>
    %133 = vector.broadcast %132 : f32 to vector<16x16xf32>
    %134 = arith.mulf %133, %124 : vector<16x16xf32>
    %135 = arith.addf %111, %134 : vector<16x16xf32>
    %c1_i32_83 = arith.constant 1 : i32
    %136 = arith.addi %0, %c1_i32_83 : i32
    %c2_i32_84 = arith.constant 2 : i32
    %137 = arith.muli %136, %c2_i32_84 : i32
    %c0_i32_85 = arith.constant 0 : i32
    %138 = arith.addi %137, %c0_i32_85 : i32
    %c9_i32_86 = arith.constant 9 : i32
    %139 = arith.muli %138, %c9_i32_86 : i32
    %c3_i32_87 = arith.constant 3 : i32
    %140 = arith.addi %139, %c3_i32_87 : i32
    %c2_i32_88 = arith.constant 2 : i32
    %141 = arith.addi %140, %c2_i32_88 : i32
    %142 = arith.index_cast %141 : i32 to index
    %143 = memref.load %arg2[%142] : memref<72xf32, #tpu.memory_space<smem>>
    %144 = vector.broadcast %143 : f32 to vector<16x16xf32>
    %145 = arith.mulf %144, %124 : vector<16x16xf32>
    %146 = arith.addf %122, %145 : vector<16x16xf32>
    %c0_89 = arith.constant 0 : index
    %c0_90 = arith.constant 0 : index
    %c3_91 = arith.constant 3 : index
    %c1_92 = arith.constant 1 : index
    %147 = vector.load %arg4[%c0_89, %c0_90, %c3_91, %c1_92] : memref<1x2x20x20xf32, #tpu.memory_space<vmem>>, vector<1x1x16x16xf32>
    %148 = vector.shape_cast %147 : vector<1x1x16x16xf32> to vector<16x16xf32>
    %c0_i32_93 = arith.constant 0 : i32
    %149 = arith.addi %0, %c0_i32_93 : i32
    %c2_i32_94 = arith.constant 2 : i32
    %150 = arith.muli %149, %c2_i32_94 : i32
    %c0_i32_95 = arith.constant 0 : i32
    %151 = arith.addi %150, %c0_i32_95 : i32
    %c9_i32_96 = arith.constant 9 : i32
    %152 = arith.muli %151, %c9_i32_96 : i32
    %c6_i32 = arith.constant 6 : i32
    %153 = arith.addi %152, %c6_i32 : i32
    %c0_i32_97 = arith.constant 0 : i32
    %154 = arith.addi %153, %c0_i32_97 : i32
    %155 = arith.index_cast %154 : i32 to index
    %156 = memref.load %arg2[%155] : memref<72xf32, #tpu.memory_space<smem>>
    %157 = vector.broadcast %156 : f32 to vector<16x16xf32>
    %158 = arith.mulf %157, %148 : vector<16x16xf32>
    %159 = arith.addf %135, %158 : vector<16x16xf32>
    %c1_i32_98 = arith.constant 1 : i32
    %160 = arith.addi %0, %c1_i32_98 : i32
    %c2_i32_99 = arith.constant 2 : i32
    %161 = arith.muli %160, %c2_i32_99 : i32
    %c0_i32_100 = arith.constant 0 : i32
    %162 = arith.addi %161, %c0_i32_100 : i32
    %c9_i32_101 = arith.constant 9 : i32
    %163 = arith.muli %162, %c9_i32_101 : i32
    %c6_i32_102 = arith.constant 6 : i32
    %164 = arith.addi %163, %c6_i32_102 : i32
    %c0_i32_103 = arith.constant 0 : i32
    %165 = arith.addi %164, %c0_i32_103 : i32
    %166 = arith.index_cast %165 : i32 to index
    %167 = memref.load %arg2[%166] : memref<72xf32, #tpu.memory_space<smem>>
    %168 = vector.broadcast %167 : f32 to vector<16x16xf32>
    %169 = arith.mulf %168, %148 : vector<16x16xf32>
    %170 = arith.addf %146, %169 : vector<16x16xf32>
    %c0_104 = arith.constant 0 : index
    %c0_105 = arith.constant 0 : index
    %c3_106 = arith.constant 3 : index
    %c2_107 = arith.constant 2 : index
    %171 = vector.load %arg4[%c0_104, %c0_105, %c3_106, %c2_107] : memref<1x2x20x20xf32, #tpu.memory_space<vmem>>, vector<1x1x16x16xf32>
    %172 = vector.shape_cast %171 : vector<1x1x16x16xf32> to vector<16x16xf32>
    %c0_i32_108 = arith.constant 0 : i32
    %173 = arith.addi %0, %c0_i32_108 : i32
    %c2_i32_109 = arith.constant 2 : i32
    %174 = arith.muli %173, %c2_i32_109 : i32
    %c0_i32_110 = arith.constant 0 : i32
    %175 = arith.addi %174, %c0_i32_110 : i32
    %c9_i32_111 = arith.constant 9 : i32
    %176 = arith.muli %175, %c9_i32_111 : i32
    %c6_i32_112 = arith.constant 6 : i32
    %177 = arith.addi %176, %c6_i32_112 : i32
    %c1_i32_113 = arith.constant 1 : i32
    %178 = arith.addi %177, %c1_i32_113 : i32
    %179 = arith.index_cast %178 : i32 to index
    %180 = memref.load %arg2[%179] : memref<72xf32, #tpu.memory_space<smem>>
    %181 = vector.broadcast %180 : f32 to vector<16x16xf32>
    %182 = arith.mulf %181, %172 : vector<16x16xf32>
    %183 = arith.addf %159, %182 : vector<16x16xf32>
    %c1_i32_114 = arith.constant 1 : i32
    %184 = arith.addi %0, %c1_i32_114 : i32
    %c2_i32_115 = arith.constant 2 : i32
    %185 = arith.muli %184, %c2_i32_115 : i32
    %c0_i32_116 = arith.constant 0 : i32
    %186 = arith.addi %185, %c0_i32_116 : i32
    %c9_i32_117 = arith.constant 9 : i32
    %187 = arith.muli %186, %c9_i32_117 : i32
    %c6_i32_118 = arith.constant 6 : i32
    %188 = arith.addi %187, %c6_i32_118 : i32
    %c1_i32_119 = arith.constant 1 : i32
    %189 = arith.addi %188, %c1_i32_119 : i32
    %190 = arith.index_cast %189 : i32 to index
    %191 = memref.load %arg2[%190] : memref<72xf32, #tpu.memory_space<smem>>
    %192 = vector.broadcast %191 : f32 to vector<16x16xf32>
    %193 = arith.mulf %192, %172 : vector<16x16xf32>
    %194 = arith.addf %170, %193 : vector<16x16xf32>
    %c0_120 = arith.constant 0 : index
    %c0_121 = arith.constant 0 : index
    %c3_122 = arith.constant 3 : index
    %c3_123 = arith.constant 3 : index
    %195 = vector.load %arg4[%c0_120, %c0_121, %c3_122, %c3_123] : memref<1x2x20x20xf32, #tpu.memory_space<vmem>>, vector<1x1x16x16xf32>
    %196 = vector.shape_cast %195 : vector<1x1x16x16xf32> to vector<16x16xf32>
    %c0_i32_124 = arith.constant 0 : i32
    %197 = arith.addi %0, %c0_i32_124 : i32
    %c2_i32_125 = arith.constant 2 : i32
    %198 = arith.muli %197, %c2_i32_125 : i32
    %c0_i32_126 = arith.constant 0 : i32
    %199 = arith.addi %198, %c0_i32_126 : i32
    %c9_i32_127 = arith.constant 9 : i32
    %200 = arith.muli %199, %c9_i32_127 : i32
    %c6_i32_128 = arith.constant 6 : i32
    %201 = arith.addi %200, %c6_i32_128 : i32
    %c2_i32_129 = arith.constant 2 : i32
    %202 = arith.addi %201, %c2_i32_129 : i32
    %203 = arith.index_cast %202 : i32 to index
    %204 = memref.load %arg2[%203] : memref<72xf32, #tpu.memory_space<smem>>
    %205 = vector.broadcast %204 : f32 to vector<16x16xf32>
    %206 = arith.mulf %205, %196 : vector<16x16xf32>
    %207 = arith.addf %183, %206 : vector<16x16xf32>
    %c1_i32_130 = arith.constant 1 : i32
    %208 = arith.addi %0, %c1_i32_130 : i32
    %c2_i32_131 = arith.constant 2 : i32
    %209 = arith.muli %208, %c2_i32_131 : i32
    %c0_i32_132 = arith.constant 0 : i32
    %210 = arith.addi %209, %c0_i32_132 : i32
    %c9_i32_133 = arith.constant 9 : i32
    %211 = arith.muli %210, %c9_i32_133 : i32
    %c6_i32_134 = arith.constant 6 : i32
    %212 = arith.addi %211, %c6_i32_134 : i32
    %c2_i32_135 = arith.constant 2 : i32
    %213 = arith.addi %212, %c2_i32_135 : i32
    %214 = arith.index_cast %213 : i32 to index
    %215 = memref.load %arg2[%214] : memref<72xf32, #tpu.memory_space<smem>>
    %216 = vector.broadcast %215 : f32 to vector<16x16xf32>
    %217 = arith.mulf %216, %196 : vector<16x16xf32>
    %218 = arith.addf %194, %217 : vector<16x16xf32>
    %c0_136 = arith.constant 0 : index
    %c1_137 = arith.constant 1 : index
    %c1_138 = arith.constant 1 : index
    %c1_139 = arith.constant 1 : index
    %219 = vector.load %arg4[%c0_136, %c1_137, %c1_138, %c1_139] : memref<1x2x20x20xf32, #tpu.memory_space<vmem>>, vector<1x1x16x16xf32>
    %220 = vector.shape_cast %219 : vector<1x1x16x16xf32> to vector<16x16xf32>
    %c0_i32_140 = arith.constant 0 : i32
    %221 = arith.addi %0, %c0_i32_140 : i32
    %c2_i32_141 = arith.constant 2 : i32
    %222 = arith.muli %221, %c2_i32_141 : i32
    %c1_i32_142 = arith.constant 1 : i32
    %223 = arith.addi %222, %c1_i32_142 : i32
    %c9_i32_143 = arith.constant 9 : i32
    %224 = arith.muli %223, %c9_i32_143 : i32
    %c0_i32_144 = arith.constant 0 : i32
    %225 = arith.addi %224, %c0_i32_144 : i32
    %c0_i32_145 = arith.constant 0 : i32
    %226 = arith.addi %225, %c0_i32_145 : i32
    %227 = arith.index_cast %226 : i32 to index
    %228 = memref.load %arg2[%227] : memref<72xf32, #tpu.memory_space<smem>>
    %229 = vector.broadcast %228 : f32 to vector<16x16xf32>
    %230 = arith.mulf %229, %220 : vector<16x16xf32>
    %231 = arith.addf %207, %230 : vector<16x16xf32>
    %c1_i32_146 = arith.constant 1 : i32
    %232 = arith.addi %0, %c1_i32_146 : i32
    %c2_i32_147 = arith.constant 2 : i32
    %233 = arith.muli %232, %c2_i32_147 : i32
    %c1_i32_148 = arith.constant 1 : i32
    %234 = arith.addi %233, %c1_i32_148 : i32
    %c9_i32_149 = arith.constant 9 : i32
    %235 = arith.muli %234, %c9_i32_149 : i32
    %c0_i32_150 = arith.constant 0 : i32
    %236 = arith.addi %235, %c0_i32_150 : i32
    %c0_i32_151 = arith.constant 0 : i32
    %237 = arith.addi %236, %c0_i32_151 : i32
    %238 = arith.index_cast %237 : i32 to index
    %239 = memref.load %arg2[%238] : memref<72xf32, #tpu.memory_space<smem>>
    %240 = vector.broadcast %239 : f32 to vector<16x16xf32>
    %241 = arith.mulf %240, %220 : vector<16x16xf32>
    %242 = arith.addf %218, %241 : vector<16x16xf32>
    %c0_152 = arith.constant 0 : index
    %c1_153 = arith.constant 1 : index
    %c1_154 = arith.constant 1 : index
    %c2_155 = arith.constant 2 : index
    %243 = vector.load %arg4[%c0_152, %c1_153, %c1_154, %c2_155] : memref<1x2x20x20xf32, #tpu.memory_space<vmem>>, vector<1x1x16x16xf32>
    %244 = vector.shape_cast %243 : vector<1x1x16x16xf32> to vector<16x16xf32>
    %c0_i32_156 = arith.constant 0 : i32
    %245 = arith.addi %0, %c0_i32_156 : i32
    %c2_i32_157 = arith.constant 2 : i32
    %246 = arith.muli %245, %c2_i32_157 : i32
    %c1_i32_158 = arith.constant 1 : i32
    %247 = arith.addi %246, %c1_i32_158 : i32
    %c9_i32_159 = arith.constant 9 : i32
    %248 = arith.muli %247, %c9_i32_159 : i32
    %c0_i32_160 = arith.constant 0 : i32
    %249 = arith.addi %248, %c0_i32_160 : i32
    %c1_i32_161 = arith.constant 1 : i32
    %250 = arith.addi %249, %c1_i32_161 : i32
    %251 = arith.index_cast %250 : i32 to index
    %252 = memref.load %arg2[%251] : memref<72xf32, #tpu.memory_space<smem>>
    %253 = vector.broadcast %252 : f32 to vector<16x16xf32>
    %254 = arith.mulf %253, %244 : vector<16x16xf32>
    %255 = arith.addf %231, %254 : vector<16x16xf32>
    %c1_i32_162 = arith.constant 1 : i32
    %256 = arith.addi %0, %c1_i32_162 : i32
    %c2_i32_163 = arith.constant 2 : i32
    %257 = arith.muli %256, %c2_i32_163 : i32
    %c1_i32_164 = arith.constant 1 : i32
    %258 = arith.addi %257, %c1_i32_164 : i32
    %c9_i32_165 = arith.constant 9 : i32
    %259 = arith.muli %258, %c9_i32_165 : i32
    %c0_i32_166 = arith.constant 0 : i32
    %260 = arith.addi %259, %c0_i32_166 : i32
    %c1_i32_167 = arith.constant 1 : i32
    %261 = arith.addi %260, %c1_i32_167 : i32
    %262 = arith.index_cast %261 : i32 to index
    %263 = memref.load %arg2[%262] : memref<72xf32, #tpu.memory_space<smem>>
    %264 = vector.broadcast %263 : f32 to vector<16x16xf32>
    %265 = arith.mulf %264, %244 : vector<16x16xf32>
    %266 = arith.addf %242, %265 : vector<16x16xf32>
    %c0_168 = arith.constant 0 : index
    %c1_169 = arith.constant 1 : index
    %c1_170 = arith.constant 1 : index
    %c3_171 = arith.constant 3 : index
    %267 = vector.load %arg4[%c0_168, %c1_169, %c1_170, %c3_171] : memref<1x2x20x20xf32, #tpu.memory_space<vmem>>, vector<1x1x16x16xf32>
    %268 = vector.shape_cast %267 : vector<1x1x16x16xf32> to vector<16x16xf32>
    %c0_i32_172 = arith.constant 0 : i32
    %269 = arith.addi %0, %c0_i32_172 : i32
    %c2_i32_173 = arith.constant 2 : i32
    %270 = arith.muli %269, %c2_i32_173 : i32
    %c1_i32_174 = arith.constant 1 : i32
    %271 = arith.addi %270, %c1_i32_174 : i32
    %c9_i32_175 = arith.constant 9 : i32
    %272 = arith.muli %271, %c9_i32_175 : i32
    %c0_i32_176 = arith.constant 0 : i32
    %273 = arith.addi %272, %c0_i32_176 : i32
    %c2_i32_177 = arith.constant 2 : i32
    %274 = arith.addi %273, %c2_i32_177 : i32
    %275 = arith.index_cast %274 : i32 to index
    %276 = memref.load %arg2[%275] : memref<72xf32, #tpu.memory_space<smem>>
    %277 = vector.broadcast %276 : f32 to vector<16x16xf32>
    %278 = arith.mulf %277, %268 : vector<16x16xf32>
    %279 = arith.addf %255, %278 : vector<16x16xf32>
    %c1_i32_178 = arith.constant 1 : i32
    %280 = arith.addi %0, %c1_i32_178 : i32
    %c2_i32_179 = arith.constant 2 : i32
    %281 = arith.muli %280, %c2_i32_179 : i32
    %c1_i32_180 = arith.constant 1 : i32
    %282 = arith.addi %281, %c1_i32_180 : i32
    %c9_i32_181 = arith.constant 9 : i32
    %283 = arith.muli %282, %c9_i32_181 : i32
    %c0_i32_182 = arith.constant 0 : i32
    %284 = arith.addi %283, %c0_i32_182 : i32
    %c2_i32_183 = arith.constant 2 : i32
    %285 = arith.addi %284, %c2_i32_183 : i32
    %286 = arith.index_cast %285 : i32 to index
    %287 = memref.load %arg2[%286] : memref<72xf32, #tpu.memory_space<smem>>
    %288 = vector.broadcast %287 : f32 to vector<16x16xf32>
    %289 = arith.mulf %288, %268 : vector<16x16xf32>
    %290 = arith.addf %266, %289 : vector<16x16xf32>
    %c0_184 = arith.constant 0 : index
    %c1_185 = arith.constant 1 : index
    %c2_186 = arith.constant 2 : index
    %c1_187 = arith.constant 1 : index
    %291 = vector.load %arg4[%c0_184, %c1_185, %c2_186, %c1_187] : memref<1x2x20x20xf32, #tpu.memory_space<vmem>>, vector<1x1x16x16xf32>
    %292 = vector.shape_cast %291 : vector<1x1x16x16xf32> to vector<16x16xf32>
    %c0_i32_188 = arith.constant 0 : i32
    %293 = arith.addi %0, %c0_i32_188 : i32
    %c2_i32_189 = arith.constant 2 : i32
    %294 = arith.muli %293, %c2_i32_189 : i32
    %c1_i32_190 = arith.constant 1 : i32
    %295 = arith.addi %294, %c1_i32_190 : i32
    %c9_i32_191 = arith.constant 9 : i32
    %296 = arith.muli %295, %c9_i32_191 : i32
    %c3_i32_192 = arith.constant 3 : i32
    %297 = arith.addi %296, %c3_i32_192 : i32
    %c0_i32_193 = arith.constant 0 : i32
    %298 = arith.addi %297, %c0_i32_193 : i32
    %299 = arith.index_cast %298 : i32 to index
    %300 = memref.load %arg2[%299] : memref<72xf32, #tpu.memory_space<smem>>
    %301 = vector.broadcast %300 : f32 to vector<16x16xf32>
    %302 = arith.mulf %301, %292 : vector<16x16xf32>
    %303 = arith.addf %279, %302 : vector<16x16xf32>
    %c1_i32_194 = arith.constant 1 : i32
    %304 = arith.addi %0, %c1_i32_194 : i32
    %c2_i32_195 = arith.constant 2 : i32
    %305 = arith.muli %304, %c2_i32_195 : i32
    %c1_i32_196 = arith.constant 1 : i32
    %306 = arith.addi %305, %c1_i32_196 : i32
    %c9_i32_197 = arith.constant 9 : i32
    %307 = arith.muli %306, %c9_i32_197 : i32
    %c3_i32_198 = arith.constant 3 : i32
    %308 = arith.addi %307, %c3_i32_198 : i32
    %c0_i32_199 = arith.constant 0 : i32
    %309 = arith.addi %308, %c0_i32_199 : i32
    %310 = arith.index_cast %309 : i32 to index
    %311 = memref.load %arg2[%310] : memref<72xf32, #tpu.memory_space<smem>>
    %312 = vector.broadcast %311 : f32 to vector<16x16xf32>
    %313 = arith.mulf %312, %292 : vector<16x16xf32>
    %314 = arith.addf %290, %313 : vector<16x16xf32>
    %c0_200 = arith.constant 0 : index
    %c1_201 = arith.constant 1 : index
    %c2_202 = arith.constant 2 : index
    %c2_203 = arith.constant 2 : index
    %315 = vector.load %arg4[%c0_200, %c1_201, %c2_202, %c2_203] : memref<1x2x20x20xf32, #tpu.memory_space<vmem>>, vector<1x1x16x16xf32>
    %316 = vector.shape_cast %315 : vector<1x1x16x16xf32> to vector<16x16xf32>
    %c0_i32_204 = arith.constant 0 : i32
    %317 = arith.addi %0, %c0_i32_204 : i32
    %c2_i32_205 = arith.constant 2 : i32
    %318 = arith.muli %317, %c2_i32_205 : i32
    %c1_i32_206 = arith.constant 1 : i32
    %319 = arith.addi %318, %c1_i32_206 : i32
    %c9_i32_207 = arith.constant 9 : i32
    %320 = arith.muli %319, %c9_i32_207 : i32
    %c3_i32_208 = arith.constant 3 : i32
    %321 = arith.addi %320, %c3_i32_208 : i32
    %c1_i32_209 = arith.constant 1 : i32
    %322 = arith.addi %321, %c1_i32_209 : i32
    %323 = arith.index_cast %322 : i32 to index
    %324 = memref.load %arg2[%323] : memref<72xf32, #tpu.memory_space<smem>>
    %325 = vector.broadcast %324 : f32 to vector<16x16xf32>
    %326 = arith.mulf %325, %316 : vector<16x16xf32>
    %327 = arith.addf %303, %326 : vector<16x16xf32>
    %c1_i32_210 = arith.constant 1 : i32
    %328 = arith.addi %0, %c1_i32_210 : i32
    %c2_i32_211 = arith.constant 2 : i32
    %329 = arith.muli %328, %c2_i32_211 : i32
    %c1_i32_212 = arith.constant 1 : i32
    %330 = arith.addi %329, %c1_i32_212 : i32
    %c9_i32_213 = arith.constant 9 : i32
    %331 = arith.muli %330, %c9_i32_213 : i32
    %c3_i32_214 = arith.constant 3 : i32
    %332 = arith.addi %331, %c3_i32_214 : i32
    %c1_i32_215 = arith.constant 1 : i32
    %333 = arith.addi %332, %c1_i32_215 : i32
    %334 = arith.index_cast %333 : i32 to index
    %335 = memref.load %arg2[%334] : memref<72xf32, #tpu.memory_space<smem>>
    %336 = vector.broadcast %335 : f32 to vector<16x16xf32>
    %337 = arith.mulf %336, %316 : vector<16x16xf32>
    %338 = arith.addf %314, %337 : vector<16x16xf32>
    %c0_216 = arith.constant 0 : index
    %c1_217 = arith.constant 1 : index
    %c2_218 = arith.constant 2 : index
    %c3_219 = arith.constant 3 : index
    %339 = vector.load %arg4[%c0_216, %c1_217, %c2_218, %c3_219] : memref<1x2x20x20xf32, #tpu.memory_space<vmem>>, vector<1x1x16x16xf32>
    %340 = vector.shape_cast %339 : vector<1x1x16x16xf32> to vector<16x16xf32>
    %c0_i32_220 = arith.constant 0 : i32
    %341 = arith.addi %0, %c0_i32_220 : i32
    %c2_i32_221 = arith.constant 2 : i32
    %342 = arith.muli %341, %c2_i32_221 : i32
    %c1_i32_222 = arith.constant 1 : i32
    %343 = arith.addi %342, %c1_i32_222 : i32
    %c9_i32_223 = arith.constant 9 : i32
    %344 = arith.muli %343, %c9_i32_223 : i32
    %c3_i32_224 = arith.constant 3 : i32
    %345 = arith.addi %344, %c3_i32_224 : i32
    %c2_i32_225 = arith.constant 2 : i32
    %346 = arith.addi %345, %c2_i32_225 : i32
    %347 = arith.index_cast %346 : i32 to index
    %348 = memref.load %arg2[%347] : memref<72xf32, #tpu.memory_space<smem>>
    %349 = vector.broadcast %348 : f32 to vector<16x16xf32>
    %350 = arith.mulf %349, %340 : vector<16x16xf32>
    %351 = arith.addf %327, %350 : vector<16x16xf32>
    %c1_i32_226 = arith.constant 1 : i32
    %352 = arith.addi %0, %c1_i32_226 : i32
    %c2_i32_227 = arith.constant 2 : i32
    %353 = arith.muli %352, %c2_i32_227 : i32
    %c1_i32_228 = arith.constant 1 : i32
    %354 = arith.addi %353, %c1_i32_228 : i32
    %c9_i32_229 = arith.constant 9 : i32
    %355 = arith.muli %354, %c9_i32_229 : i32
    %c3_i32_230 = arith.constant 3 : i32
    %356 = arith.addi %355, %c3_i32_230 : i32
    %c2_i32_231 = arith.constant 2 : i32
    %357 = arith.addi %356, %c2_i32_231 : i32
    %358 = arith.index_cast %357 : i32 to index
    %359 = memref.load %arg2[%358] : memref<72xf32, #tpu.memory_space<smem>>
    %360 = vector.broadcast %359 : f32 to vector<16x16xf32>
    %361 = arith.mulf %360, %340 : vector<16x16xf32>
    %362 = arith.addf %338, %361 : vector<16x16xf32>
    %c0_232 = arith.constant 0 : index
    %c1_233 = arith.constant 1 : index
    %c3_234 = arith.constant 3 : index
    %c1_235 = arith.constant 1 : index
    %363 = vector.load %arg4[%c0_232, %c1_233, %c3_234, %c1_235] : memref<1x2x20x20xf32, #tpu.memory_space<vmem>>, vector<1x1x16x16xf32>
    %364 = vector.shape_cast %363 : vector<1x1x16x16xf32> to vector<16x16xf32>
    %c0_i32_236 = arith.constant 0 : i32
    %365 = arith.addi %0, %c0_i32_236 : i32
    %c2_i32_237 = arith.constant 2 : i32
    %366 = arith.muli %365, %c2_i32_237 : i32
    %c1_i32_238 = arith.constant 1 : i32
    %367 = arith.addi %366, %c1_i32_238 : i32
    %c9_i32_239 = arith.constant 9 : i32
    %368 = arith.muli %367, %c9_i32_239 : i32
    %c6_i32_240 = arith.constant 6 : i32
    %369 = arith.addi %368, %c6_i32_240 : i32
    %c0_i32_241 = arith.constant 0 : i32
    %370 = arith.addi %369, %c0_i32_241 : i32
    %371 = arith.index_cast %370 : i32 to index
    %372 = memref.load %arg2[%371] : memref<72xf32, #tpu.memory_space<smem>>
    %373 = vector.broadcast %372 : f32 to vector<16x16xf32>
    %374 = arith.mulf %373, %364 : vector<16x16xf32>
    %375 = arith.addf %351, %374 : vector<16x16xf32>
    %c1_i32_242 = arith.constant 1 : i32
    %376 = arith.addi %0, %c1_i32_242 : i32
    %c2_i32_243 = arith.constant 2 : i32
    %377 = arith.muli %376, %c2_i32_243 : i32
    %c1_i32_244 = arith.constant 1 : i32
    %378 = arith.addi %377, %c1_i32_244 : i32
    %c9_i32_245 = arith.constant 9 : i32
    %379 = arith.muli %378, %c9_i32_245 : i32
    %c6_i32_246 = arith.constant 6 : i32
    %380 = arith.addi %379, %c6_i32_246 : i32
    %c0_i32_247 = arith.constant 0 : i32
    %381 = arith.addi %380, %c0_i32_247 : i32
    %382 = arith.index_cast %381 : i32 to index
    %383 = memref.load %arg2[%382] : memref<72xf32, #tpu.memory_space<smem>>
    %384 = vector.broadcast %383 : f32 to vector<16x16xf32>
    %385 = arith.mulf %384, %364 : vector<16x16xf32>
    %386 = arith.addf %362, %385 : vector<16x16xf32>
    %c0_248 = arith.constant 0 : index
    %c1_249 = arith.constant 1 : index
    %c3_250 = arith.constant 3 : index
    %c2_251 = arith.constant 2 : index
    %387 = vector.load %arg4[%c0_248, %c1_249, %c3_250, %c2_251] : memref<1x2x20x20xf32, #tpu.memory_space<vmem>>, vector<1x1x16x16xf32>
    %388 = vector.shape_cast %387 : vector<1x1x16x16xf32> to vector<16x16xf32>
    %c0_i32_252 = arith.constant 0 : i32
    %389 = arith.addi %0, %c0_i32_252 : i32
    %c2_i32_253 = arith.constant 2 : i32
    %390 = arith.muli %389, %c2_i32_253 : i32
    %c1_i32_254 = arith.constant 1 : i32
    %391 = arith.addi %390, %c1_i32_254 : i32
    %c9_i32_255 = arith.constant 9 : i32
    %392 = arith.muli %391, %c9_i32_255 : i32
    %c6_i32_256 = arith.constant 6 : i32
    %393 = arith.addi %392, %c6_i32_256 : i32
    %c1_i32_257 = arith.constant 1 : i32
    %394 = arith.addi %393, %c1_i32_257 : i32
    %395 = arith.index_cast %394 : i32 to index
    %396 = memref.load %arg2[%395] : memref<72xf32, #tpu.memory_space<smem>>
    %397 = vector.broadcast %396 : f32 to vector<16x16xf32>
    %398 = arith.mulf %397, %388 : vector<16x16xf32>
    %399 = arith.addf %375, %398 : vector<16x16xf32>
    %c1_i32_258 = arith.constant 1 : i32
    %400 = arith.addi %0, %c1_i32_258 : i32
    %c2_i32_259 = arith.constant 2 : i32
    %401 = arith.muli %400, %c2_i32_259 : i32
    %c1_i32_260 = arith.constant 1 : i32
    %402 = arith.addi %401, %c1_i32_260 : i32
    %c9_i32_261 = arith.constant 9 : i32
    %403 = arith.muli %402, %c9_i32_261 : i32
    %c6_i32_262 = arith.constant 6 : i32
    %404 = arith.addi %403, %c6_i32_262 : i32
    %c1_i32_263 = arith.constant 1 : i32
    %405 = arith.addi %404, %c1_i32_263 : i32
    %406 = arith.index_cast %405 : i32 to index
    %407 = memref.load %arg2[%406] : memref<72xf32, #tpu.memory_space<smem>>
    %408 = vector.broadcast %407 : f32 to vector<16x16xf32>
    %409 = arith.mulf %408, %388 : vector<16x16xf32>
    %410 = arith.addf %386, %409 : vector<16x16xf32>
    %c0_264 = arith.constant 0 : index
    %c1_265 = arith.constant 1 : index
    %c3_266 = arith.constant 3 : index
    %c3_267 = arith.constant 3 : index
    %411 = vector.load %arg4[%c0_264, %c1_265, %c3_266, %c3_267] : memref<1x2x20x20xf32, #tpu.memory_space<vmem>>, vector<1x1x16x16xf32>
    %412 = vector.shape_cast %411 : vector<1x1x16x16xf32> to vector<16x16xf32>
    %c0_i32_268 = arith.constant 0 : i32
    %413 = arith.addi %0, %c0_i32_268 : i32
    %c2_i32_269 = arith.constant 2 : i32
    %414 = arith.muli %413, %c2_i32_269 : i32
    %c1_i32_270 = arith.constant 1 : i32
    %415 = arith.addi %414, %c1_i32_270 : i32
    %c9_i32_271 = arith.constant 9 : i32
    %416 = arith.muli %415, %c9_i32_271 : i32
    %c6_i32_272 = arith.constant 6 : i32
    %417 = arith.addi %416, %c6_i32_272 : i32
    %c2_i32_273 = arith.constant 2 : i32
    %418 = arith.addi %417, %c2_i32_273 : i32
    %419 = arith.index_cast %418 : i32 to index
    %420 = memref.load %arg2[%419] : memref<72xf32, #tpu.memory_space<smem>>
    %421 = vector.broadcast %420 : f32 to vector<16x16xf32>
    %422 = arith.mulf %421, %412 : vector<16x16xf32>
    %423 = arith.addf %399, %422 : vector<16x16xf32>
    %c1_i32_274 = arith.constant 1 : i32
    %424 = arith.addi %0, %c1_i32_274 : i32
    %c2_i32_275 = arith.constant 2 : i32
    %425 = arith.muli %424, %c2_i32_275 : i32
    %c1_i32_276 = arith.constant 1 : i32
    %426 = arith.addi %425, %c1_i32_276 : i32
    %c9_i32_277 = arith.constant 9 : i32
    %427 = arith.muli %426, %c9_i32_277 : i32
    %c6_i32_278 = arith.constant 6 : i32
    %428 = arith.addi %427, %c6_i32_278 : i32
    %c2_i32_279 = arith.constant 2 : i32
    %429 = arith.addi %428, %c2_i32_279 : i32
    %430 = arith.index_cast %429 : i32 to index
    %431 = memref.load %arg2[%430] : memref<72xf32, #tpu.memory_space<smem>>
    %432 = vector.broadcast %431 : f32 to vector<16x16xf32>
    %433 = arith.mulf %432, %412 : vector<16x16xf32>
    %434 = arith.addf %410, %433 : vector<16x16xf32>
    %c0_i32_280 = arith.constant 0 : i32
    %435 = arith.addi %0, %c0_i32_280 : i32
    %436 = arith.index_cast %435 : i32 to index
    %437 = memref.load %arg3[%436] : memref<4xf32, #tpu.memory_space<smem>>
    %438 = vector.broadcast %437 : f32 to vector<16x16xf32>
    %439 = arith.addf %423, %438 : vector<16x16xf32>
    %c0_281 = arith.constant 0 : index
    %c0_282 = arith.constant 0 : index
    %c0_283 = arith.constant 0 : index
    %c0_284 = arith.constant 0 : index
    %440 = vector.load %arg5[%c0_281, %c0_282, %c0_283, %c0_284] : memref<1x2x16x16xf32, #tpu.memory_space<vmem>>, vector<1x1x16x16xf32>
    %441 = vector.shape_cast %440 : vector<1x1x16x16xf32> to vector<16x16xf32>
    %442 = vector.shape_cast %439 : vector<16x16xf32> to vector<1x1x16x16xf32>
    tpu.vector_store %arg5[%c0_281, %c0_282, %c0_283, %c0_284], %442 {strides = array<i32>} : memref<1x2x16x16xf32, #tpu.memory_space<vmem>>, vector<1x1x16x16xf32>,
    %c1_i32_285 = arith.constant 1 : i32
    %443 = arith.addi %0, %c1_i32_285 : i32
    %444 = arith.index_cast %443 : i32 to index
    %445 = memref.load %arg3[%444] : memref<4xf32, #tpu.memory_space<smem>>
    %446 = vector.broadcast %445 : f32 to vector<16x16xf32>
    %447 = arith.addf %434, %446 : vector<16x16xf32>
    %c0_286 = arith.constant 0 : index
    %c1_287 = arith.constant 1 : index
    %c0_288 = arith.constant 0 : index
    %c0_289 = arith.constant 0 : index
    %448 = vector.load %arg5[%c0_286, %c1_287, %c0_288, %c0_289] : memref<1x2x16x16xf32, #tpu.memory_space<vmem>>, vector<1x1x16x16xf32>
    %449 = vector.shape_cast %448 : vector<1x1x16x16xf32> to vector<16x16xf32>
    %450 = vector.shape_cast %447 : vector<16x16xf32> to vector<1x1x16x16xf32>
    tpu.vector_store %arg5[%c0_286, %c1_287, %c0_288, %c0_289], %450 {strides = array<i32>} : memref<1x2x16x16xf32, #tpu.memory_space<vmem>>, vector<1x1x16x16xf32>,
    return
  }
  func.func @transform_0(%arg0: i32, %arg1: i32) -> i32 {
    %c0_i32 = arith.constant 0 : i32
    %c0_i32_0 = arith.constant 0 : i32
    return %c0_i32 : i32
  }
  func.func @transform_1(%arg0: i32, %arg1: i32) -> i32 {
    %c0_i32 = arith.constant 0 : i32
    %c0_i32_0 = arith.constant 0 : i32
    return %c0_i32 : i32
  }
  func.func @transform_2(%arg0: i32, %arg1: i32) -> (i32, i32, i32, i32) {
    %c0_i32 = arith.constant 0 : i32
    %0 = arith.addi %c0_i32, %arg1 : i32
    %c0_i32_0 = arith.constant 0 : i32
    %c0_i32_1 = arith.constant 0 : i32
    %c0_i32_2 = arith.constant 0 : i32
    return %arg0, %0, %c0_i32_0, %c0_i32_1 : i32, i32, i32, i32
  }
  func.func @transform_3(%arg0: i32, %arg1: i32) -> (i32, i32, i32, i32) {
    %c0_i32 = arith.constant 0 : i32
    %c0_i32_0 = arith.constant 0 : i32
    %c0_i32_1 = arith.constant 0 : i32
    return %arg0, %arg1, %c0_i32, %c0_i32_0 : i32, i32, i32, i32
  }
}

</mosaic_0001>

<llo_original>
// kernel: tpu_custom_call.1
$region0: #{tpu_custom_call.1}
  #allocation0 [shape = 'u32[]', space=smem, size = 0x4, offset = 0x4, fixed_abs, tag = 'smem constant byte address 0x4 - core index']
  #allocation1 [shape = 'u32[144,128]{1,0:T(1,128)}', space=vmem, size = 0x12000, scoped, tag = 'internal scratch']
  %s0 = inlined_call_operand.vmem [shape: f32[72], index: 0, kind: input, shape index: {}]
  %s1 = inlined_call_operand.vmem [shape: f32[4], index: 1, kind: input, shape index: {}]
  %s2 = inlined_call_operand.vmem [shape: f32[2,8,20,20], index: 2, kind: input, shape index: {}]
  %s3 = inlined_call_operand.hbm [shape: f32[2,4,16,16], index: 3, kind: output, shape index: {}]
  %s4 = sld [smem:[#allocation0]]
  $region53: #{tpu_custom_call.1} parent=0
    _
  %s6 = ssub.s32 1, %s4
  %s7 = scalar_select 0, %s6, %s4
  $region1: #{tpu_custom_call.1} parent=0
    #allocation2 [shape = 'u8[512]{0}', space=smem, size = 0x200, scoped, tag = 'input window, operand 0, single buffered']
    #allocation3 [shape = 's32[2]{0}', space=sflag, size = 0x8, scoped, tag = 'scoped memory for tpu_custom_call.1']
    #allocation4 [shape = 's32[2]{0}', space=sflag, size = 0x8, scoped, tag = 'scoped memory for tpu_custom_call.1']
    #allocation5 [shape = 'u8[512]{0}', space=smem, size = 0x200, scoped, tag = 'input window, operand 1, single buffered']
    #allocation6 [shape = 's32[1]{0}', space=sflag, size = 0x4, scoped, tag = 'scoped memory for tpu_custom_call.1']
    #allocation7 [shape = 'u8[32768]{0}', space=vmem, size = 0x8000, scoped, tag = 'output window, operand 0']
    %8 = vsyncpa [#allocation4], 0
    %9 = vsyncpa [#allocation6], 0
    %10 = vsyncpa [#allocation3], 0
    %s11 = scalar_lea.sflag [#allocation3], 1
    %12 = vsyncpa %s11, 0
    loop: start=0, step=1, limit=6
    $region2: #{tpu_custom_call.1} parent=1 // loop_pre_header
      _
    $region3: #{tpu_custom_call.1} parent=1 // loop_header
      %s14 = sphi 0, %s18
      %p15 = scmp.ge.s32.totalorder %s14, 6
      %s21 = sphi 0, %s33
      %s22 = sphi 0, %s29
      %s23 = sphi 0, %s21
      %s24 = sphi 0, %s22
      %s25 = sphi 0, %s23
      %s26 = sphi 0, %s24
      %s34 = sphi 0, %s34
      %s36 = sphi 0, %s34
      %s37 = sphi 0, %s36
      %s51 = sphi 0, %s37
      %s55 = sphi 0, %s55
      %s57 = sphi 0, %s55
      %s58 = sphi 0, %s57
      %s72 = sphi 0, %s58
      %s80 = sphi 0, %s82
      %s83 = sphi 0, %s80
      %s84 = sphi 0, %s83
      %s100 = sphi 0, %s84
      %s108 = sphi 0, %s110
      %s111 = sphi 0, %s108
      %s112 = sphi 0, %s111
      %s128 = sphi 0, %s112
    $region4: #{tpu_custom_call.1} parent=1 // loop_header_branch
      %17 = sbr.rel (%p15) target = $region8
    $region5: #{tpu_custom_call.1} parent=1 // loop_body
      %s19 = ssub.s32 %s14, 1
      %s20 = ssub.s32 %s14, 2
      %s27 = sadd.s32 1, %s22
      %p28 = scmp.ge.s32.totalorder %s27, 2
      %s29 = scalar_select %p28, 0, %s27
      %s30 = sadd.s32 1, %s21
      %s31 = scalar_select %p28, %s30, %s21
      %p32 = scmp.ge.s32.totalorder %s31, 2
      %s33 = scalar_select %p32, 0, %s31
      %s35 = sadd.s32 %s34, 1
      %p38 = scmp.eq.s32.totalorder %s14, 3
      %p39 = scmp.ne.s32.totalorder %s34, %s36
      %p40 = scmp.eq.s32.totalorder %s14, 0
      %p41 = por %p39, %p40
      %p42 = scmp.ne.s32.totalorder %s34, %s36
      %p43 = scmp.eq.s32.totalorder %s19, 3
      %p44 = por %p42, %p43
      %p45 = scmp.ne.s32.totalorder %s36, %s37
      %p46 = scmp.eq.s32.totalorder %s19, 0
      %p47 = por %p45, %p46
      %p48 = scmp.ne.s32.totalorder %s36, %s37
      %p49 = scmp.eq.s32.totalorder %s20, 3
      %p50 = por %p48, %p49
      %p52 = scmp.ne.s32.totalorder %s37, %s51
      %p53 = scmp.eq.s32.totalorder %s20, 0
      %p54 = por %p52, %p53
      %s56 = sadd.s32 %s55, 1
      %p59 = scmp.eq.s32.totalorder %s14, 3
      %p60 = scmp.ne.s32.totalorder %s55, %s57
      %p61 = scmp.eq.s32.totalorder %s14, 0
      %p62 = por %p60, %p61
      %p63 = scmp.ne.s32.totalorder %s55, %s57
      %p64 = scmp.eq.s32.totalorder %s19, 3
      %p65 = por %p63, %p64
      %p66 = scmp.ne.s32.totalorder %s57, %s58
      %p67 = scmp.eq.s32.totalorder %s19, 0
      %p68 = por %p66, %p67
      %p69 = scmp.ne.s32.totalorder %s57, %s58
      %p70 = scmp.eq.s32.totalorder %s20, 3
      %p71 = por %p69, %p70
      %p73 = scmp.ne.s32.totalorder %s58, %s72
      %p74 = scmp.eq.s32.totalorder %s20, 0
      %p75 = por %p73, %p74
      %s76 = ssub.s32 %s21, %s33
      %s77 = ssub.s32 %s22, %s29
      %s78 = sor.u32 %s76, %s77
      %p79 = scmp.eq.s32.totalorder %s78, 0
      %s81 = sadd.s32 %s80, 1
      %s82 = scalar_select %p79, %s80, %s81
      %p85 = pneg %p79
      %p86 = scmp.eq.s32.totalorder %s14, 3
      %p87 = por %p85, %p86
      %p88 = scmp.ne.s32.totalorder %s80, %s83
      %p89 = scmp.eq.s32.totalorder %s14, 0
      %p90 = por %p88, %p89
      %p91 = scmp.ne.s32.totalorder %s80, %s83
      %p92 = scmp.eq.s32.totalorder %s19, 3
      %p93 = por %p91, %p92
      %p94 = scmp.ne.s32.totalorder %s83, %s84
      %p95 = scmp.eq.s32.totalorder %s19, 0
      %p96 = por %p94, %p95
      %p97 = scmp.ne.s32.totalorder %s83, %s84
      %p98 = scmp.eq.s32.totalorder %s20, 3
      %p99 = por %p97, %p98
      %p101 = scmp.ne.s32.totalorder %s84, %s100
      %p102 = scmp.eq.s32.totalorder %s20, 0
      %p103 = por %p101, %p102
      %s104 = ssub.s32 %s21, %s33
      %s105 = ssub.s32 %s22, %s29
      %s106 = sor.u32 %s104, %s105
      %p107 = scmp.eq.s32.totalorder %s106, 0
      %s109 = sadd.s32 %s108, 1
      %s110 = scalar_select %p107, %s108, %s109
      %p113 = pneg %p107
      %p114 = scmp.eq.s32.totalorder %s14, 3
      %p115 = por %p113, %p114
      %p116 = scmp.ne.s32.totalorder %s108, %s111
      %p117 = scmp.eq.s32.totalorder %s14, 0
      %p118 = por %p116, %p117
      %p119 = scmp.ne.s32.totalorder %s108, %s111
      %p120 = scmp.eq.s32.totalorder %s19, 3
      %p121 = por %p119, %p120
      %p122 = scmp.ne.s32.totalorder %s111, %s112
      %p123 = scmp.eq.s32.totalorder %s19, 0
      %p124 = por %p122, %p123
      %p125 = scmp.ne.s32.totalorder %s111, %s112
      %p126 = scmp.eq.s32.totalorder %s20, 3
      %p127 = por %p125, %p126
      %p129 = scmp.ne.s32.totalorder %s112, %s128
      %p130 = scmp.eq.s32.totalorder %s20, 0
      %p131 = por %p129, %p130
      %p132 = scmp.le.s32.totalorder 1, %s14
      %p133 = scmp.lt.s32.totalorder %s14, 5
      %p134 = pnand %p132, %p133
      %p135 = pneg %p134
      // Predicated region
      $region9: #{tpu_custom_call.1} parent=5 // pred_check
        _
      $region10: #{tpu_custom_call.1} parent=5 // pred_check_branch
        %137 = sbr.rel (%p134) target = $region12
      $region11: #{tpu_custom_call.1} parent=5 // pred_region
        %s138 = ssub.s32 %s14, 1
        // Predicated region
        $region13: #{tpu_custom_call.1} parent=11 // pred_check
          %p139 = pneg %p47
        $region14: #{tpu_custom_call.1} parent=11 // pred_check_branch
          %141 = sbr.rel (%p139) target = $region16
        $region15: #{tpu_custom_call.1} parent=11 // pred_region
          %s143 = ssub.s32 16, 16
          %144 = vsyncadd [#allocation4], %s143
          %s146 = sshll.u32 %s0, 4
          %s147 = int_to_ptr.vmem [resolvable:$true] %s146
          %149 = dma.vmem_to_smem %s147, 16, [#allocation2], [#allocation4]
        $region16: #{tpu_custom_call.1} parent=11 // pred_fallthru
          _
        // Predicated region
        $region17: #{tpu_custom_call.1} parent=11 // pred_check
          %p150 = pneg %p68
        $region18: #{tpu_custom_call.1} parent=11 // pred_check_branch
          %152 = sbr.rel (%p150) target = $region20
        $region19: #{tpu_custom_call.1} parent=11 // pred_region
          %s154 = ssub.s32 16, 16
          %155 = vsyncadd [#allocation6], %s154
          %s157 = sshll.u32 %s1, 4
          %s158 = int_to_ptr.vmem [resolvable:$true] %s157
          %160 = dma.vmem_to_smem %s158, 16, [#allocation5], [#allocation6]
        $region20: #{tpu_custom_call.1} parent=11 // pred_fallthru
          _
      $region12: #{tpu_custom_call.1} parent=5 // pred_fallthru
        _
      %p161 = scmp.lt.s32.totalorder %s14, 4
      // Predicated region
      $region21: #{tpu_custom_call.1} parent=5 // pred_check
        %p162 = pneg %p161
      $region22: #{tpu_custom_call.1} parent=5 // pred_check_branch
        %164 = sbr.rel (%p162) target = $region24
      $region23: #{tpu_custom_call.1} parent=5 // pred_region
        // Predicated region
        $region25: #{tpu_custom_call.1} parent=23 // pred_check
          %p165 = pneg %p90
        $region26: #{tpu_custom_call.1} parent=23 // pred_check_branch
          %167 = sbr.rel (%p165) target = $region28
        $region27: #{tpu_custom_call.1} parent=23 // pred_region
          %s168 = smul.u32 2, %s22
          %p169 = scmp.lt.s32.totalorder %s21, 1
          %s170 = scalar_select %p169, %s21, 1
          %p171 = scmp.lt.s32.totalorder %s168, 7
          %s172 = scalar_select %p171, %s168, 7
          %s173 = smul.addr %s172, 3
          %s174 = smul.addr %s170, 24
          %s175 = sadd.s32 %s173, %s174
          %s176 = smul.addr %s175, 8
          %s177 = scalar_lea.vmem %s2, %s176
          %s178 = smul.u32 2, %s22
        $region28: #{tpu_custom_call.1} parent=23 // pred_fallthru
          _
      $region24: #{tpu_custom_call.1} parent=5 // pred_fallthru
        _
      %p179 = scmp.le.s32.totalorder 1, %s14
      %p180 = scmp.lt.s32.totalorder %s14, 5
      %p181 = pnand %p179, %p180
      %p182 = pneg %p181
      // Predicated region
      $region29: #{tpu_custom_call.1} parent=5 // pred_check
        _
      $region30: #{tpu_custom_call.1} parent=5 // pred_check_branch
        %184 = sbr.rel (%p181) target = $region32
      $region31: #{tpu_custom_call.1} parent=5 // pred_region
        %s185 = ssub.s32 %s14, 1
        // Predicated region
        $region33: #{tpu_custom_call.1} parent=31 // pred_check
          %p186 = pneg %p47
        $region34: #{tpu_custom_call.1} parent=31 // pred_check_branch
          %188 = sbr.rel (%p186) target = $region36
        $region35: #{tpu_custom_call.1} parent=31 // pred_region
          %189 = dma.done [#allocation4], 16
        $region36: #{tpu_custom_call.1} parent=31 // pred_fallthru
          _
        // Predicated region
        $region37: #{tpu_custom_call.1} parent=31 // pred_check
          %p190 = pneg %p68
        $region38: #{tpu_custom_call.1} parent=31 // pred_check_branch
          %192 = sbr.rel (%p190) target = $region40
        $region39: #{tpu_custom_call.1} parent=31 // pred_region
          %193 = dma.done [#allocation6], 16
        $region40: #{tpu_custom_call.1} parent=31 // pred_fallthru
          _
        %194 = sfence
        %p195 = pneg %p47
        %p196 = pneg %p44
        %p197 = pneg %p68
        %p198 = pneg %p65
        %s199 = smul.u32 2, %s24
        %p200 = scmp.lt.s32.totalorder %s23, 1
        %s201 = scalar_select %p200, %s23, 1
        %p202 = scmp.lt.s32.totalorder %s199, 7
        %s203 = scalar_select %p202, %s199, 7
        %s204 = smul.addr %s203, 3
        %s205 = smul.addr %s201, 24
        %s206 = sadd.s32 %s204, %s205
        %s207 = smul.addr %s206, 8
        %s208 = scalar_lea.vmem %s2, %s207
        %p209 = pneg %p96
        %p210 = pneg %p93
        %p211 = pneg %p124
        %p212 = pneg %p121
        %s213 = sand.u32 %s111, 1
        %s214 = scalar_lea.sflag [#allocation3], %s213
        %s215 = sand.u32 %s111, 1
        %s216 = smul.addr %s215, 32
        %s217 = scalar_lea.vmem [#allocation7], %s216
        %s218 = smul.u32 2, %s24
        %p219 = scmp.lt.s32.totalorder %s23, 1
        %s220 = scalar_select %p219, %s23, 1
        %p221 = scmp.lt.s32.totalorder %s218, 7
        %s222 = scalar_select %p221, %s218, 7
        %s223 = smul.addr %s222, 3
        %s224 = smul.addr %s220, 24
        %s225 = sadd.s32 %s223, %s224
        %s226 = smul.addr %s225, 8
        %s227 = scalar_lea.vmem %s2, %s226
        %s228 = smul.u32 2, %s24
        %s229 = smul.u32 2, %s24
        %s230 = smul.u32 %s24, 2
        %v231 = vld [vmem:[%s227 + $0x1] sm:$0xff]
        %v232 = vld [vmem:[%s227 + $0x9] sm:$0xff]
        %s233 = smul.u32 %s24, 36
        %s234 = sld [smem:[#allocation2 + %s233]]
        %v235 = vstv %s234
        %v236 = vmul.f32 %v235, %v231
        %v237 = vmul.f32 %v235, %v232
        %v238 = vadd.f32 %v236, 0.0
        %v239 = vadd.f32 %v237, 0.0
        %s240 = sadd.s32 %s230, 1
        %s241 = smul.u32 %s240, 18
        %s242 = sld [smem:[#allocation2 + %s241]]
        %v243 = vstv %s242
        %v244 = vmul.f32 %v243, %v231
        %v245 = vmul.f32 %v243, %v232
        %v246 = vadd.f32 %v244, 0.0
        %v247 = vadd.f32 %v245, 0.0
        %s248 = sadd.s32 %s233, 1
        %s249 = sld [smem:[#allocation2 + %s248]]
        %v250 = vstv %s249
        %v251 = vmul.f32 %v250, %v231
        %v252 = vmul.f32 %v250, %v232
        %255 = vrot.lane.b32.xlu0 %v251, 127
        %v256 = vpop.permute.xlu0 %255
        %257 = vrot.lane.b32.xlu0 %v252, 127
        %v258 = vpop.permute.xlu0 %257
        %v261 = vadd.f32 %v238, %v256
        %v262 = vadd.f32 %v239, %v258
        %s263 = sadd.s32 %s241, 1
        %s264 = sld [smem:[#allocation2 + %s263]]
        %v265 = vstv %s264
        %v266 = vmul.f32 %v265, %v231
        %v267 = vmul.f32 %v265, %v232
        %270 = vrot.lane.b32.xlu0 %v266, 127
        %v271 = vpop.permute.xlu0 %270
        %272 = vrot.lane.b32.xlu0 %v267, 127
        %v273 = vpop.permute.xlu0 %272
        %v276 = vadd.f32 %v246, %v271
        %v277 = vadd.f32 %v247, %v273
        %s278 = sadd.s32 %s233, 2
        %s279 = sld [smem:[#allocation2 + %s278]]
        %v280 = vstv %s279
        %v281 = vmul.f32 %v280, %v231
        %v282 = vmul.f32 %v280, %v232
        %285 = vrot.lane.b32.xlu0 %v281, 126
        %v286 = vpop.permute.xlu0 %285
        %287 = vrot.lane.b32.xlu0 %v282, 126
        %v288 = vpop.permute.xlu0 %287
        %v291 = vadd.f32 %v261, %v286
        %v292 = vadd.f32 %v262, %v288
        %s293 = sadd.s32 %s241, 2
        %s294 = sld [smem:[#allocation2 + %s293]]
        %v295 = vstv %s294
        %v296 = vmul.f32 %v295, %v231
        %v297 = vmul.f32 %v295, %v232
        %300 = vrot.lane.b32.xlu0 %v296, 126
        %v301 = vpop.permute.xlu0 %300
        %302 = vrot.lane.b32.xlu0 %v297, 126
        %v303 = vpop.permute.xlu0 %302
        %v306 = vadd.f32 %v276, %v301
        %v307 = vadd.f32 %v277, %v303
        %v308 = vld [vmem:[%s227 + $0x2] sm:$0xff]
        %v309 = vld [vmem:[%s227 + $0xa] sm:$0xff]
        %s310 = sadd.s32 %s233, 3
        %s311 = sld [smem:[#allocation2 + %s310]]
        %v312 = vstv %s311
        %v313 = vmul.f32 %v312, %v308
        %v314 = vmul.f32 %v312, %v309
        %v315 = vadd.f32 %v291, %v313
        %v316 = vadd.f32 %v292, %v314
        %s317 = sadd.s32 %s241, 3
        %s318 = sld [smem:[#allocation2 + %s317]]
        %v319 = vstv %s318
        %v320 = vmul.f32 %v319, %v308
        %v321 = vmul.f32 %v319, %v309
        %v322 = vadd.f32 %v306, %v320
        %v323 = vadd.f32 %v307, %v321
        %s324 = sadd.s32 %s233, 4
        %s325 = sld [smem:[#allocation2 + %s324]]
        %v326 = vstv %s325
        %v327 = vmul.f32 %v326, %v308
        %v328 = vmul.f32 %v326, %v309
        %331 = vrot.lane.b32.xlu0 %v327, 127
        %v332 = vpop.permute.xlu0 %331
        %333 = vrot.lane.b32.xlu0 %v328, 127
        %v334 = vpop.permute.xlu0 %333
        %v337 = vadd.f32 %v315, %v332
        %v338 = vadd.f32 %v316, %v334
        %s339 = sadd.s32 %s241, 4
        %s340 = sld [smem:[#allocation2 + %s339]]
        %v341 = vstv %s340
        %v342 = vmul.f32 %v341, %v308
        %v343 = vmul.f32 %v341, %v309
        %346 = vrot.lane.b32.xlu0 %v342, 127
        %v347 = vpop.permute.xlu0 %346
        %348 = vrot.lane.b32.xlu0 %v343, 127
        %v349 = vpop.permute.xlu0 %348
        %v352 = vadd.f32 %v322, %v347
        %v353 = vadd.f32 %v323, %v349
        %s354 = sadd.s32 %s233, 5
        %s355 = sld [smem:[#allocation2 + %s354]]
        %v356 = vstv %s355
        %v357 = vmul.f32 %v356, %v308
        %v358 = vmul.f32 %v356, %v309
        %361 = vrot.lane.b32.xlu0 %v357, 126
        %v362 = vpop.permute.xlu0 %361
        %363 = vrot.lane.b32.xlu0 %v358, 126
        %v364 = vpop.permute.xlu0 %363
        %v367 = vadd.f32 %v337, %v362
        %v368 = vadd.f32 %v338, %v364
        %s369 = sadd.s32 %s241, 5
        %s370 = sld [smem:[#allocation2 + %s369]]
        %v371 = vstv %s370
        %v372 = vmul.f32 %v371, %v308
        %v373 = vmul.f32 %v371, %v309
        %376 = vrot.lane.b32.xlu0 %v372, 126
        %v377 = vpop.permute.xlu0 %376
        %378 = vrot.lane.b32.xlu0 %v373, 126
        %v379 = vpop.permute.xlu0 %378
        %v382 = vadd.f32 %v352, %v377
        %v383 = vadd.f32 %v353, %v379
        %v384 = vld [vmem:[%s227 + $0x3] sm:$0xff]
        %v385 = vld [vmem:[%s227 + $0xb] sm:$0xff]
        %s386 = sadd.s32 %s233, 6
        %s387 = sld [smem:[#allocation2 + %s386]]
        %v388 = vstv %s387
        %v389 = vmul.f32 %v388, %v384
        %v390 = vmul.f32 %v388, %v385
        %v391 = vadd.f32 %v367, %v389
        %v392 = vadd.f32 %v368, %v390
        %s393 = sadd.s32 %s241, 6
        %s394 = sld [smem:[#allocation2 + %s393]]
        %v395 = vstv %s394
        %v396 = vmul.f32 %v395, %v384
        %v397 = vmul.f32 %v395, %v385
        %v398 = vadd.f32 %v382, %v396
        %v399 = vadd.f32 %v383, %v397
        %s400 = sadd.s32 %s233, 7
        %s401 = sld [smem:[#allocation2 + %s400]]
        %v402 = vstv %s401
        %v403 = vmul.f32 %v402, %v384
        %v404 = vmul.f32 %v402, %v385
        %407 = vrot.lane.b32.xlu0 %v403, 127
        %v408 = vpop.permute.xlu0 %407
        %409 = vrot.lane.b32.xlu0 %v404, 127
        %v410 = vpop.permute.xlu0 %409
        %v413 = vadd.f32 %v391, %v408
        %v414 = vadd.f32 %v392, %v410
        %s415 = sadd.s32 %s241, 7
        %s416 = sld [smem:[#allocation2 + %s415]]
        %v417 = vstv %s416
        %v418 = vmul.f32 %v417, %v384
        %v419 = vmul.f32 %v417, %v385
        %422 = vrot.lane.b32.xlu0 %v418, 127
        %v423 = vpop.permute.xlu0 %422
        %424 = vrot.lane.b32.xlu0 %v419, 127
        %v425 = vpop.permute.xlu0 %424
        %v428 = vadd.f32 %v398, %v423
        %v429 = vadd.f32 %v399, %v425
        %s430 = sadd.s32 %s233, 8
        %s431 = sld [smem:[#allocation2 + %s430]]
        %v432 = vstv %s431
        %v433 = vmul.f32 %v432, %v384
        %v434 = vmul.f32 %v432, %v385
        %437 = vrot.lane.b32.xlu0 %v433, 126
        %v438 = vpop.permute.xlu0 %437
        %439 = vrot.lane.b32.xlu0 %v434, 126
        %v440 = vpop.permute.xlu0 %439
        %v443 = vadd.f32 %v413, %v438
        %v444 = vadd.f32 %v414, %v440
        %s445 = sadd.s32 %s241, 8
        %s446 = sld [smem:[#allocation2 + %s445]]
        %v447 = vstv %s446
        %v448 = vmul.f32 %v447, %v384
        %v449 = vmul.f32 %v447, %v385
        %452 = vrot.lane.b32.xlu0 %v448, 126
        %v453 = vpop.permute.xlu0 %452
        %454 = vrot.lane.b32.xlu0 %v449, 126
        %v455 = vpop.permute.xlu0 %454
        %v458 = vadd.f32 %v428, %v453
        %v459 = vadd.f32 %v429, %v455
        %s460 = scalar_lea.vmem %s227, 24
        %v461 = vld [vmem:[%s460 + $0x1] sm:$0xff]
        %v462 = vld [vmem:[%s460 + $0x9] sm:$0xff]
        %s463 = smul.u32 %s24, 4
        %s464 = sadd.s32 %s463, 1
        %s465 = smul.u32 %s464, 9
        %s466 = sld [smem:[#allocation2 + %s465]]
        %v467 = vstv %s466
        %v468 = vmul.f32 %v467, %v461
        %v469 = vmul.f32 %v467, %v462
        %v470 = vadd.f32 %v443, %v468
        %v471 = vadd.f32 %v444, %v469
        %s472 = smul.u32 %s240, 2
        %s473 = sadd.s32 %s472, 1
        %s474 = smul.u32 %s473, 9
        %s475 = sld [smem:[#allocation2 + %s474]]
        %v476 = vstv %s475
        %v477 = vmul.f32 %v476, %v461
        %v478 = vmul.f32 %v476, %v462
        %v479 = vadd.f32 %v458, %v477
        %v480 = vadd.f32 %v459, %v478
        %s481 = sadd.s32 %s465, 1
        %s482 = sld [smem:[#allocation2 + %s481]]
        %v483 = vstv %s482
        %v484 = vmul.f32 %v483, %v461
        %v485 = vmul.f32 %v483, %v462
        %488 = vrot.lane.b32.xlu0 %v484, 127
        %v489 = vpop.permute.xlu0 %488
        %490 = vrot.lane.b32.xlu0 %v485, 127
        %v491 = vpop.permute.xlu0 %490
        %v494 = vadd.f32 %v470, %v489
        %v495 = vadd.f32 %v471, %v491
        %s496 = sadd.s32 %s474, 1
        %s497 = sld [smem:[#allocation2 + %s496]]
        %v498 = vstv %s497
        %v499 = vmul.f32 %v498, %v461
        %v500 = vmul.f32 %v498, %v462
        %503 = vrot.lane.b32.xlu0 %v499, 127
        %v504 = vpop.permute.xlu0 %503
        %505 = vrot.lane.b32.xlu0 %v500, 127
        %v506 = vpop.permute.xlu0 %505
        %v509 = vadd.f32 %v479, %v504
        %v510 = vadd.f32 %v480, %v506
        %s511 = sadd.s32 %s465, 2
        %s512 = sld [smem:[#allocation2 + %s511]]
        %v513 = vstv %s512
        %v514 = vmul.f32 %v513, %v461
        %v515 = vmul.f32 %v513, %v462
        %518 = vrot.lane.b32.xlu0 %v514, 126
        %v519 = vpop.permute.xlu0 %518
        %520 = vrot.lane.b32.xlu0 %v515, 126
        %v521 = vpop.permute.xlu0 %520
        %v524 = vadd.f32 %v494, %v519
        %v525 = vadd.f32 %v495, %v521
        %s526 = sadd.s32 %s474, 2
        %s527 = sld [smem:[#allocation2 + %s526]]
        %v528 = vstv %s527
        %v529 = vmul.f32 %v528, %v461
        %v530 = vmul.f32 %v528, %v462
        %533 = vrot.lane.b32.xlu0 %v529, 126
        %v534 = vpop.permute.xlu0 %533
        %535 = vrot.lane.b32.xlu0 %v530, 126
        %v536 = vpop.permute.xlu0 %535
        %v539 = vadd.f32 %v509, %v534
        %v540 = vadd.f32 %v510, %v536
        %v541 = vld [vmem:[%s460 + $0x2] sm:$0xff]
        %v542 = vld [vmem:[%s460 + $0xa] sm:$0xff]
        %s543 = sadd.s32 %s465, 3
        %s544 = sld [smem:[#allocation2 + %s543]]
        %v545 = vstv %s544
        %v546 = vmul.f32 %v545, %v541
        %v547 = vmul.f32 %v545, %v542
        %v548 = vadd.f32 %v524, %v546
        %v549 = vadd.f32 %v525, %v547
        %s550 = sadd.s32 %s474, 3
        %s551 = sld [smem:[#allocation2 + %s550]]
        %v552 = vstv %s551
        %v553 = vmul.f32 %v552, %v541
        %v554 = vmul.f32 %v552, %v542
        %v555 = vadd.f32 %v539, %v553
        %v556 = vadd.f32 %v540, %v554
        %s557 = sadd.s32 %s465, 4
        %s558 = sld [smem:[#allocation2 + %s557]]
        %v559 = vstv %s558
        %v560 = vmul.f32 %v559, %v541
        %v561 = vmul.f32 %v559, %v542
        %564 = vrot.lane.b32.xlu0 %v560, 127
        %v565 = vpop.permute.xlu0 %564
        %566 = vrot.lane.b32.xlu0 %v561, 127
        %v567 = vpop.permute.xlu0 %566
        %v570 = vadd.f32 %v548, %v565
        %v571 = vadd.f32 %v549, %v567
        %s572 = sadd.s32 %s474, 4
        %s573 = sld [smem:[#allocation2 + %s572]]
        %v574 = vstv %s573
        %v575 = vmul.f32 %v574, %v541
        %v576 = vmul.f32 %v574, %v542
        %579 = vrot.lane.b32.xlu0 %v575, 127
        %v580 = vpop.permute.xlu0 %579
        %581 = vrot.lane.b32.xlu0 %v576, 127
        %v582 = vpop.permute.xlu0 %581
        %v585 = vadd.f32 %v555, %v580
        %v586 = vadd.f32 %v556, %v582
        %s587 = sadd.s32 %s465, 5
        %s588 = sld [smem:[#allocation2 + %s587]]
        %v589 = vstv %s588
        %v590 = vmul.f32 %v589, %v541
        %v591 = vmul.f32 %v589, %v542
        %594 = vrot.lane.b32.xlu0 %v590, 126
        %v595 = vpop.permute.xlu0 %594
        %596 = vrot.lane.b32.xlu0 %v591, 126
        %v597 = vpop.permute.xlu0 %596
        %v600 = vadd.f32 %v570, %v595
        %v601 = vadd.f32 %v571, %v597
        %s602 = sadd.s32 %s474, 5
        %s603 = sld [smem:[#allocation2 + %s602]]
        %v604 = vstv %s603
        %v605 = vmul.f32 %v604, %v541
        %v606 = vmul.f32 %v604, %v542
        %609 = vrot.lane.b32.xlu0 %v605, 126
        %v610 = vpop.permute.xlu0 %609
        %611 = vrot.lane.b32.xlu0 %v606, 126
        %v612 = vpop.permute.xlu0 %611
        %v615 = vadd.f32 %v585, %v610
        %v616 = vadd.f32 %v586, %v612
        %v617 = vld [vmem:[%s460 + $0x3] sm:$0xff]
        %v618 = vld [vmem:[%s460 + $0xb] sm:$0xff]
        %s619 = sadd.s32 %s465, 6
        %s620 = sld [smem:[#allocation2 + %s619]]
        %v621 = vstv %s620
        %v622 = vmul.f32 %v621, %v617
        %v623 = vmul.f32 %v621, %v618
        %v624 = vadd.f32 %v600, %v622
        %v625 = vadd.f32 %v601, %v623
        %s626 = sadd.s32 %s474, 6
        %s627 = sld [smem:[#allocation2 + %s626]]
        %v628 = vstv %s627
        %v629 = vmul.f32 %v628, %v617
        %v630 = vmul.f32 %v628, %v618
        %v631 = vadd.f32 %v615, %v629
        %v632 = vadd.f32 %v616, %v630
        %s633 = sadd.s32 %s465, 7
        %s634 = sld [smem:[#allocation2 + %s633]]
        %v635 = vstv %s634
        %v636 = vmul.f32 %v635, %v617
        %v637 = vmul.f32 %v635, %v618
        %640 = vrot.lane.b32.xlu0 %v636, 127
        %v641 = vpop.permute.xlu0 %640
        %642 = vrot.lane.b32.xlu0 %v637, 127
        %v643 = vpop.permute.xlu0 %642
        %v646 = vadd.f32 %v624, %v641
        %v647 = vadd.f32 %v625, %v643
        %s648 = sadd.s32 %s474, 7
        %s649 = sld [smem:[#allocation2 + %s648]]
        %v650 = vstv %s649
        %v651 = vmul.f32 %v650, %v617
        %v652 = vmul.f32 %v650, %v618
        %655 = vrot.lane.b32.xlu0 %v651, 127
        %v656 = vpop.permute.xlu0 %655
        %657 = vrot.lane.b32.xlu0 %v652, 127
        %v658 = vpop.permute.xlu0 %657
        %v661 = vadd.f32 %v631, %v656
        %v662 = vadd.f32 %v632, %v658
        %s663 = sadd.s32 %s465, 8
        %s664 = sld [smem:[#allocation2 + %s663]]
        %v665 = vstv %s664
        %v666 = vmul.f32 %v665, %v617
        %v667 = vmul.f32 %v665, %v618
        %670 = vrot.lane.b32.xlu0 %v666, 126
        %v671 = vpop.permute.xlu0 %670
        %672 = vrot.lane.b32.xlu0 %v667, 126
        %v673 = vpop.permute.xlu0 %672
        %v676 = vadd.f32 %v646, %v671
        %v677 = vadd.f32 %v647, %v673
        %s678 = sadd.s32 %s474, 8
        %s679 = sld [smem:[#allocation2 + %s678]]
        %v680 = vstv %s679
        %v681 = vmul.f32 %v680, %v617
        %v682 = vmul.f32 %v680, %v618
        %685 = vrot.lane.b32.xlu0 %v681, 126
        %v686 = vpop.permute.xlu0 %685
        %687 = vrot.lane.b32.xlu0 %v682, 126
        %v688 = vpop.permute.xlu0 %687
        %v691 = vadd.f32 %v661, %v686
        %v692 = vadd.f32 %v662, %v688
        %s693 = sld [smem:[#allocation5 + %s230]]
        %v694 = vstv %s693
        %v695 = vadd.f32 %v676, %v694
        %v696 = vadd.f32 %v677, %v694
        %699 = vrot.lane.b32.xlu0 %v695, 127
        %v700 = vpop.permute.xlu0 %699
        %701 = vrot.lane.b32.xlu0 %v696, 127
        %v702 = vpop.permute.xlu0 %701
        %vm705 = vcmask 130048
        %706 = vst.msk [vmem:[%s217] sm:$0xff] %vm705, %v700
        %707 = vst.msk [vmem:[%s217 + $0x8] sm:$0xff] %vm705, %v702
        %s708 = sld [smem:[#allocation5 + %s240]]
        %v709 = vstv %s708
        %v710 = vadd.f32 %v691, %v709
        %v711 = vadd.f32 %v692, %v709
        %714 = vrot.lane.b32.xlu0 %v710, 127
        %v715 = vpop.permute.xlu0 %714
        %716 = vrot.lane.b32.xlu0 %v711, 127
        %v717 = vpop.permute.xlu0 %716
        %s720 = scalar_lea.vmem %s217, 16 [#allocation7]
        %721 = vst.msk [vmem:[%s720] sm:$0xff] %vm705, %v715
        %722 = vst.msk [vmem:[%s720 + $0x8] sm:$0xff] %vm705, %v717
        %s723 = sand.u32 %s111, 1
        %s724 = scalar_lea.sflag [#allocation3], %s723
        %s725 = sand.u32 %s111, 1
        %s726 = smul.addr %s725, 32
        %s727 = scalar_lea.vmem [#allocation7], %s726
        // Predicated region
        $region41: #{tpu_custom_call.1} parent=31 // pred_check
          %p728 = pneg %p121
        $region42: #{tpu_custom_call.1} parent=31 // pred_check_branch
          %730 = sbr.rel (%p728) target = $region44
        $region43: #{tpu_custom_call.1} parent=31 // pred_region
          %s731 = smul.u32 2, %s24
          %s733 = ssub.s32 512, 512
          %734 = vsyncadd %s724, %s733
          %s735 = smul.addr %s731, 2
          %s736 = smul.addr %s23, 8
          %s737 = sadd.s32 %s735, %s736
          %s738 = smul.addr %s737, 128
          %s739 = scalar_lea.hbm %s3, %s738
          %s740 = sshll.u32 %s727, 4
          %s741 = int_to_ptr.vmem [resolvable:$true] %s740
          %746 = dma.vmem_to_hbm [thread:$0]  %s741, 512, %s739, %s724, 128, 128, 8
        $region44: #{tpu_custom_call.1} parent=31 // pred_fallthru
          _
      $region32: #{tpu_custom_call.1} parent=5 // pred_fallthru
        _
      %p747 = scmp.le.s32.totalorder 2, %s14
      // Predicated region
      $region45: #{tpu_custom_call.1} parent=5 // pred_check
        %p748 = pneg %p747
      $region46: #{tpu_custom_call.1} parent=5 // pred_check_branch
        %750 = sbr.rel (%p748) target = $region48
      $region47: #{tpu_custom_call.1} parent=5 // pred_region
        %s751 = ssub.s32 %s14, 2
        // Predicated region
        $region49: #{tpu_custom_call.1} parent=47 // pred_check
          %p752 = pneg %p127
        $region50: #{tpu_custom_call.1} parent=47 // pred_check_branch
          %754 = sbr.rel (%p752) target = $region52
        $region51: #{tpu_custom_call.1} parent=47 // pred_region
          %s755 = sand.u32 %s112, 1
          %s756 = scalar_lea.sflag [#allocation3], %s755
          %s757 = sand.u32 %s112, 1
          %s758 = smul.addr %s757, 32
          %s759 = scalar_lea.vmem [#allocation7], %s758
          %760 = dma.done %s756, 512
        $region52: #{tpu_custom_call.1} parent=47 // pred_fallthru
          _
      $region48: #{tpu_custom_call.1} parent=5 // pred_fallthru
        _
    $region6: #{tpu_custom_call.1} parent=1 // loop_footer
      %s18 = sadd.s32 1, %s14
    $region7: #{tpu_custom_call.1} parent=1 // loop_footer_branch
      %13 = sbr.rel target = $region3
    $region8: #{tpu_custom_call.1} parent=1 // loop_exit
      _
    %761 = vsyncpa [#allocation3], 1
    %s762 = scalar_lea.sflag [#allocation3], 1
    %763 = vsyncpa %s762, 1
    %764 = vsyncpa [#allocation4], 1
    %s765 = scalar_lea.sflag [#allocation4], 1
    %766 = vsyncpa %s765, 1
    %767 = vsyncpa [#allocation6], 1

</llo_original>
